<compile_context>
chip_gen: v6e
topology: v6e:2x2x1
jax: 0.10.0
libtpu: 0.0.40
codegen_flags: <defaults>
</compile_context>

<pallas_src>
import math

import jax
import jax.numpy as jnp
from jax.experimental import pallas as pl
from jax.experimental.pallas import tpu as pltpu

_LANES = 128
_EPS = 1e-4


def _round_up(x, m):
    return ((x + m - 1) // m) * m


def _device_kind():
    try:
        return jax.devices()[0].device_kind.lower()
    except Exception:
        return ""


def _default_num_partitions():
    # Chips with 2 TensorCores per JAX device (megacore): v4, v5p, v7x.
    # On single-TC chips (v5e, v6e) a second partition is just a serial loop
    # that halves the tile size, so keep 1 there.
    kind = _device_kind()
    if any(tag in kind for tag in ("v7", "v5p", "v4")):
        return 2
    return 1


def _default_rows_per_tile():
    # ~2 MiB / f32 input block by default; ~4 MiB on v7x where 3.2 TB/s HBM
    # makes the fixed per-grid-step overhead proportionally larger.
    return 8192 if "v7" in _device_kind() else 4096


def reg_l1_theta_loss(output, target, mask, *,
                      rows_per_tile=None,
                      num_partitions=None,
                      min_kernel_elements=131072):
    """Scalar loss matching RegL1ThetaLoss.forward(output, target, mask)."""
    assert output.shape == target.shape == mask.shape
    total = math.prod(output.shape)

    if total == 0:
        return jnp.float32(0.0)

    # ---- small-input fast path: a fused XLA reduction is strictly faster ----
    if total < min_kernel_elements:
        o = output.reshape(-1).astype(jnp.float32)
        t = target.reshape(-1).astype(jnp.float32)
        m = mask.reshape(-1).astype(jnp.float32)
        s = jnp.sum(jnp.abs(o * m - t * m))
        cnt = jnp.sum((m != 0.0).astype(jnp.float32))
        return s / (cnt + _EPS)

    if rows_per_tile is None:
        rows_per_tile = _default_rows_per_tile()
    if num_partitions is None:
        num_partitions = _default_num_partitions()

    # ---- lane-dense 2-D (rows, 128) presentation of the flattened inputs ----
    padded_total = _round_up(total, _LANES)
    rows = padded_total // _LANES
    pad = padded_total - total

    def _prep(x):
        x = x.reshape(-1)                      # free (bitcast) for contiguous arrays
        if pad:
            # TODO(synk): for totals that are not a multiple of 128 this pad
            # materializes one extra HBM copy per input; a zero-copy path would
            # need 1-D blocks, which are avoided here for Mosaic-layout safety.
            x = jnp.pad(x, (0, pad))           # zeros: contribute 0 to sum and count
        return x.reshape(rows, _LANES)

    o2, t2, m2 = _prep(output), _prep(target), _prep(mask)

    # Row-tile: multiple of 32 (clean bf16/int8 native tiling), clamped to the
    # actual row count so tiny inputs don't waste VMEM.
    rows_per_tile = max(32, min(int(rows_per_tile), _round_up(rows, 32)))
    rows_per_tile = _round_up(rows_per_tile, 32)

    n_row_tiles = pl.cdiv(rows, rows_per_tile)
    num_partitions = max(1, min(int(num_partitions), n_row_tiles))
    tiles_per_part = pl.cdiv(n_row_tiles, num_partitions)
    last_tile = n_row_tiles - 1
    coverage_rows = num_partitions * tiles_per_part * rows_per_tile
    need_mask = coverage_rows > rows            # static Python bool

    def kernel(o_ref, t_ref, m_ref, sum_ref, cnt_ref):
        step = pl.program_id(1)

        @pl.when(step == 0)
        def _init():
            sum_ref[...] = jnp.zeros_like(sum_ref)
            cnt_ref[...] = jnp.zeros_like(cnt_ref)

        o = o_ref[...].astype(jnp.float32)
        t = t_ref[...].astype(jnp.float32)
        m = m_ref[...].astype(jnp.float32)

        # Same rounding order as PyTorch: |o*m - t*m| (VPU has ample slack).
        abs_diff = jnp.abs(o * m - t * m)
        nonzero = (m != 0.0).astype(jnp.float32)

        if need_mask:
            # Mask rows past the end of the (un-padded) data.  The logical
            # (unclamped) block index is used so fully-out-of-range blocks
            # (clamped to the last real block in the index_map) contribute 0.
            block_idx = pl.program_id(0) * tiles_per_part + step
            row0 = block_idx * rows_per_tile
            rid = row0 + jax.lax.broadcasted_iota(
                jnp.int32, (rows_per_tile, _LANES), 0)
            valid = rid < rows
            abs_diff = jnp.where(valid, abs_diff, 0.0)
            nonzero = jnp.where(valid, nonzero, 0.0)

        # Fold only the row axis into the resident (8,128) accumulator:
        # pure vreg-wise adds, no XLU work inside the hot loop.
        sum_ref[...] += jnp.sum(
            abs_diff.reshape(rows_per_tile // 8, 8, _LANES), axis=0)
        cnt_ref[...] += jnp.sum(
            nonzero.reshape(rows_per_tile // 8, 8, _LANES), axis=0)

    def in_index(c, i):
        # Clamp so the (at most one) excess block per partition re-reads valid
        # memory; its contribution is zeroed by the in-kernel row mask.
        return (jnp.minimum(c * tiles_per_part + i, last_tile), 0)

    in_spec = pl.BlockSpec((rows_per_tile, _LANES), in_index)
    out_spec = pl.BlockSpec((8, _LANES), lambda c, i: (c, 0))

    part_sums, part_cnts = pl.pallas_call(
        kernel,
        out_shape=(
            jax.ShapeDtypeStruct((num_partitions * 8, _LANES), jnp.float32),
            jax.ShapeDtypeStruct((num_partitions * 8, _LANES), jnp.float32),
        ),
        grid_spec=pltpu.PrefetchScalarGridSpec(
            num_scalar_prefetch=0,
            grid=(num_partitions, tiles_per_part),
            in_specs=[in_spec, in_spec, in_spec],
            out_specs=(out_spec, out_spec),
        ),
        compiler_params=pltpu.CompilerParams(
            dimension_semantics=("parallel", "arbitrary"),
            # 3 inputs x 2 buffers x (2-4 MiB) + tiny accumulators; 32 MiB is
            # within every chip's physical VMEM and raises v5e's 16 MiB default.
            vmem_limit_bytes=32 * 1024 * 1024,
        ),
    )(o2, t2, m2)

    # Single tiny cross-lane/sublane reduction + divide, done once.
    return jnp.sum(part_sums) / (jnp.sum(part_cnts) + _EPS)


def reg_l1_theta_loss_ref(output, target, mask):
    o = output.astype(jnp.float32)
    t = target.astype(jnp.float32)
    m = mask.astype(jnp.float32)
    s = jnp.sum(jnp.abs(o * m - t * m))
    cnt = jnp.sum((m != 0.0).astype(jnp.float32))
    return s / (cnt + _EPS)


if __name__ == "__main__":
    # Case 1: small regression-head shape (batch=2, K=8 objects, D=32
    # channels); total=512 is a multiple of 128 (no padding).  Forced through
    # the kernel path with min_kernel_elements=0.
    B, K, D = 2, 8, 32
    k1, k2, k3 = jax.random.split(jax.random.PRNGKey(0), 3)
    out1 = jax.random.normal(k1, (B, K, D), dtype=jnp.float32)
    tgt1 = jax.random.normal(k2, (B, K, D), dtype=jnp.float32)
    msk1 = (jax.random.uniform(k3, (B, K, D)) > 0.5).astype(jnp.float32)

    loss1 = jax.block_until_ready(
        reg_l1_theta_loss(out1, tgt1, msk1, min_kernel_elements=0))
    ref1 = reg_l1_theta_loss_ref(out1, tgt1, msk1)
    assert jnp.allclose(loss1, ref1, rtol=1e-5, atol=1e-6), (loss1, ref1)

    # Same inputs through the default small-input fast path.
    loss1_fast = jax.block_until_ready(reg_l1_theta_loss(out1, tgt1, msk1))
    assert jnp.allclose(loss1_fast, ref1, rtol=1e-5, atol=1e-6), (loss1_fast, ref1)

    # Case 2: ragged total (3*50*19 = 2850, not a multiple of 128) to exercise
    # the minimal pad + in-kernel row masking.
    k4, k5, k6 = jax.random.split(jax.random.PRNGKey(1), 3)
    out2 = jax.random.normal(k4, (3, 50, 19), dtype=jnp.float32)
    tgt2 = jax.random.normal(k5, (3, 50, 19), dtype=jnp.float32)
    msk2 = (jax.random.uniform(k6, (3, 50, 19)) > 0.3).astype(jnp.float32)

    loss2 = jax.block_until_ready(
        reg_l1_theta_loss(out2, tgt2, msk2, min_kernel_elements=0))
    ref2 = reg_l1_theta_loss_ref(out2, tgt2, msk2)
    assert jnp.allclose(loss2, ref2, rtol=1e-4, atol=1e-5), (loss2, ref2)

    # Case 3: multi-tile, 2-partition accumulation with a partial final tile
    # and a clamped excess block (9 row-tiles split across 2 partitions).
    k7, k8, k9 = jax.random.split(jax.random.PRNGKey(2), 3)
    out3 = jax.random.normal(k7, (4, 130, 128), dtype=jnp.float32)
    tgt3 = jax.random.normal(k8, (4, 130, 128), dtype=jnp.float32)
    msk3 = (jax.random.uniform(k9, (4, 130, 128)) > 0.4).astype(jnp.float32)

    loss3 = jax.block_until_ready(
        reg_l1_theta_loss(out3, tgt3, msk3, rows_per_tile=64,
                          num_partitions=2, min_kernel_elements=0))
    ref3 = reg_l1_theta_loss_ref(out3, tgt3, msk3)
    assert jnp.allclose(loss3, ref3, rtol=1e-4, atol=1e-5), (loss3, ref3)

    print("KERNEL_OK")
</pallas_src>

<mosaic_0001>
module attributes {stable_mosaic.version = 11 : i64} {
  func.func @kernel(%arg0: i32, %arg1: i32, %arg2: memref<32x128xf32, #tpu.memory_space<vmem>>, %arg3: memref<32x128xf32, #tpu.memory_space<vmem>>, %arg4: memref<32x128xf32, #tpu.memory_space<vmem>>, %arg5: memref<8x128xf32, #tpu.memory_space<vmem>>, %arg6: memref<8x128xf32, #tpu.memory_space<vmem>>) attributes {dimension_semantics = [#tpu.dimension_semantics<parallel>, #tpu.dimension_semantics<arbitrary>], iteration_bounds = array<i64: 1, 1>, scalar_prefetch = 0 : i64, scratch_operands = 0 : i64, tpu.core_type = #tpu.core_type<tc>, window_params = [{transform_indices = @transform_0, window_bounds = array<i64: 32, 128>}, {transform_indices = @transform_1, window_bounds = array<i64: 32, 128>}, {transform_indices = @transform_2, window_bounds = array<i64: 32, 128>}, {transform_indices = @transform_3, window_bounds = array<i64: 8, 128>}, {transform_indices = @transform_4, window_bounds = array<i64: 8, 128>}]} {
    %c0_i32 = arith.constant 0 : i32
    %0 = arith.cmpi eq, %arg1, %c0_i32 : i32
    %1 = arith.extui %0 : i1 to i32
    %c0_i32_0 = arith.constant 0 : i32
    %2 = arith.cmpi ne, %1, %c0_i32_0 : i32
    scf.if %2 {
      %cst_18 = arith.constant 0.000000e+00 : f32
      %36 = vector.broadcast %cst_18 : f32 to vector<8x128xf32>
      %c0_19 = arith.constant 0 : index
      %c0_20 = arith.constant 0 : index
      %37 = vector.load %arg5[%c0_19, %c0_20] : memref<8x128xf32, #tpu.memory_space<vmem>>, vector<8x128xf32>
      tpu.vector_store %arg5[%c0_19, %c0_20], %36 {strides = array<i32>} : memref<8x128xf32, #tpu.memory_space<vmem>>, vector<8x128xf32>,
      %cst_21 = arith.constant 0.000000e+00 : f32
      %38 = vector.broadcast %cst_21 : f32 to vector<8x128xf32>
      %c0_22 = arith.constant 0 : index
      %c0_23 = arith.constant 0 : index
      %39 = vector.load %arg6[%c0_22, %c0_23] : memref<8x128xf32, #tpu.memory_space<vmem>>, vector<8x128xf32>
      tpu.vector_store %arg6[%c0_22, %c0_23], %38 {strides = array<i32>} : memref<8x128xf32, #tpu.memory_space<vmem>>, vector<8x128xf32>,
    } else {
    }
    %c0 = arith.constant 0 : index
    %c0_1 = arith.constant 0 : index
    %3 = vector.load %arg2[%c0, %c0_1] : memref<32x128xf32, #tpu.memory_space<vmem>>, vector<32x128xf32>
    %c0_2 = arith.constant 0 : index
    %c0_3 = arith.constant 0 : index
    %4 = vector.load %arg3[%c0_2, %c0_3] : memref<32x128xf32, #tpu.memory_space<vmem>>, vector<32x128xf32>
    %c0_4 = arith.constant 0 : index
    %c0_5 = arith.constant 0 : index
    %5 = vector.load %arg4[%c0_4, %c0_5] : memref<32x128xf32, #tpu.memory_space<vmem>>, vector<32x128xf32>
    %6 = arith.mulf %3, %5 : vector<32x128xf32>
    %7 = arith.mulf %4, %5 : vector<32x128xf32>
    %8 = arith.subf %6, %7 : vector<32x128xf32>
    %9 = math.absf %8 : vector<32x128xf32>
    %cst = arith.constant 0.000000e+00 : f32
    %10 = vector.broadcast %cst : f32 to vector<32x128xf32>
    %11 = arith.cmpf one, %5, %10 : vector<32x128xf32>
    %12 = arith.extui %11 : vector<32x128xi1> to vector<32x128xi32>
    %13 = arith.sitofp %12 : vector<32x128xi32> to vector<32x128xf32>
    %c1_i32 = arith.constant 1 : i32
    %14 = arith.muli %arg0, %c1_i32 : i32
    %15 = arith.addi %14, %arg1 : i32
    %c32_i32 = arith.constant 32 : i32
    %16 = arith.muli %15, %c32_i32 : i32
    %17 = tpu.iota {dimensions = array<i32: 0>} : vector<32x128xi32>
    %18 = vector.broadcast %16 : i32 to vector<32x128xi32>
    %19 = arith.addi %18, %17 : vector<32x128xi32>
    %c4_i32 = arith.constant 4 : i32
    %20 = vector.broadcast %c4_i32 : i32 to vector<32x128xi32>
    %21 = arith.cmpi slt, %19, %20 : vector<32x128xi32>
    %cst_6 = arith.constant 0.000000e+00 : f32
    %22 = vector.broadcast %cst_6 : f32 to vector<32x128xf32>
    %23 = arith.select %21, %9, %22 : vector<32x128xi1>, vector<32x128xf32>
    %cst_7 = arith.constant 0.000000e+00 : f32
    %24 = vector.broadcast %cst_7 : f32 to vector<32x128xf32>
    %25 = arith.select %21, %13, %24 : vector<32x128xi1>, vector<32x128xf32>
    %c0_8 = arith.constant 0 : index
    %c0_9 = arith.constant 0 : index
    %26 = vector.load %arg5[%c0_8, %c0_9] : memref<8x128xf32, #tpu.memory_space<vmem>>, vector<8x128xf32>
    %27 = vector.shape_cast %23 : vector<32x128xf32> to vector<4x8x128xf32>
    %cst_10 = arith.constant dense<0.000000e+00> : vector<8x128xf32>
    %28 = vector.multi_reduction <add>, %27, %cst_10 [0] : vector<4x8x128xf32> to vector<8x128xf32>
    %29 = arith.addf %26, %28 : vector<8x128xf32>
    %c0_11 = arith.constant 0 : index
    %c0_12 = arith.constant 0 : index
    %30 = vector.load %arg5[%c0_11, %c0_12] : memref<8x128xf32, #tpu.memory_space<vmem>>, vector<8x128xf32>
    tpu.vector_store %arg5[%c0_11, %c0_12], %29 {strides = array<i32>} : memref<8x128xf32, #tpu.memory_space<vmem>>, vector<8x128xf32>,
    %c0_13 = arith.constant 0 : index
    %c0_14 = arith.constant 0 : index
    %31 = vector.load %arg6[%c0_13, %c0_14] : memref<8x128xf32, #tpu.memory_space<vmem>>, vector<8x128xf32>
    %32 = vector.shape_cast %25 : vector<32x128xf32> to vector<4x8x128xf32>
    %cst_15 = arith.constant dense<0.000000e+00> : vector<8x128xf32>
    %33 = vector.multi_reduction <add>, %32, %cst_15 [0] : vector<4x8x128xf32> to vector<8x128xf32>
    %34 = arith.addf %31, %33 : vector<8x128xf32>
    %c0_16 = arith.constant 0 : index
    %c0_17 = arith.constant 0 : index
    %35 = vector.load %arg6[%c0_16, %c0_17] : memref<8x128xf32, #tpu.memory_space<vmem>>, vector<8x128xf32>
    tpu.vector_store %arg6[%c0_16, %c0_17], %34 {strides = array<i32>} : memref<8x128xf32, #tpu.memory_space<vmem>>, vector<8x128xf32>,
    return
  }
  func.func @transform_0(%arg0: i32, %arg1: i32) -> (i32, i32) {
    %c1_i32 = arith.constant 1 : i32
    %0 = arith.muli %arg0, %c1_i32 : i32
    %1 = arith.addi %0, %arg1 : i32
    %c0_i32 = arith.constant 0 : i32
    %2 = arith.minsi %1, %c0_i32 : i32
    %c0_i32_0 = arith.constant 0 : i32
    %c0_i32_1 = arith.constant 0 : i32
    return %2, %c0_i32_0 : i32, i32
  }
  func.func @transform_1(%arg0: i32, %arg1: i32) -> (i32, i32) {
    %c1_i32 = arith.constant 1 : i32
    %0 = arith.muli %arg0, %c1_i32 : i32
    %1 = arith.addi %0, %arg1 : i32
    %c0_i32 = arith.constant 0 : i32
    %2 = arith.minsi %1, %c0_i32 : i32
    %c0_i32_0 = arith.constant 0 : i32
    %c0_i32_1 = arith.constant 0 : i32
    return %2, %c0_i32_0 : i32, i32
  }
  func.func @transform_2(%arg0: i32, %arg1: i32) -> (i32, i32) {
    %c1_i32 = arith.constant 1 : i32
    %0 = arith.muli %arg0, %c1_i32 : i32
    %1 = arith.addi %0, %arg1 : i32
    %c0_i32 = arith.constant 0 : i32
    %2 = arith.minsi %1, %c0_i32 : i32
    %c0_i32_0 = arith.constant 0 : i32
    %c0_i32_1 = arith.constant 0 : i32
    return %2, %c0_i32_0 : i32, i32
  }
  func.func @transform_3(%arg0: i32, %arg1: i32) -> (i32, i32) {
    %c0_i32 = arith.constant 0 : i32
    %c0_i32_0 = arith.constant 0 : i32
    return %arg0, %c0_i32 : i32, i32
  }
  func.func @transform_4(%arg0: i32, %arg1: i32) -> (i32, i32) {
    %c0_i32 = arith.constant 0 : i32
    %c0_i32_0 = arith.constant 0 : i32
    return %arg0, %c0_i32 : i32, i32
  }
}

</mosaic_0001>

<llo_original>
// kernel: tpu_custom_call.1
$region0: #{tpu_custom_call.1}
  #allocation0 [shape = 'u32[]', space=smem, size = 0x4, offset = 0x4, fixed_abs, tag = 'smem constant byte address 0x4 - core index']
  #allocation1 [shape = 'u32[144,128]{1,0:T(1,128)}', space=vmem, size = 0x12000, scoped, tag = 'internal scratch']
  %s0 = inlined_call_operand.hbm [shape: f32[4,128], index: 0, kind: input, shape index: {}]
  %s1 = inlined_call_operand.hbm [shape: f32[4,128], index: 1, kind: input, shape index: {}]
  %s2 = inlined_call_operand.hbm [shape: f32[4,128], index: 2, kind: input, shape index: {}]
  %s3 = inlined_call_operand.hbm [shape: f32[8,128], index: 3, kind: output, shape index: {0}]
  %s4 = inlined_call_operand.hbm [shape: f32[8,128], index: 4, kind: output, shape index: {1}]
  %5 = xla_tuple %s3, %s4
  %s6 = sld [smem:[#allocation0]]
  $region46: #{tpu_custom_call.1} parent=0
    _
  %s8 = ssub.s32 1, %s6
  %s9 = scalar_select 0, %s8, %s6
  $region1: #{tpu_custom_call.1} parent=0
    #allocation2 [shape = 'u8[16384]{0}', space=vmem, size = 0x4000, scoped, tag = 'input window, operand 0, single buffered']
    #allocation3 [shape = 's32[1]{0}', space=sflag, size = 0x4, scoped, tag = 'scoped memory for tpu_custom_call.1']
    #allocation4 [shape = 's32[1]{0}', space=sflag, size = 0x4, scoped, tag = 'scoped memory for tpu_custom_call.1']
    #allocation5 [shape = 'u8[16384]{0}', space=vmem, size = 0x4000, scoped, tag = 'input window, operand 1, single buffered']
    #allocation6 [shape = 's32[1]{0}', space=sflag, size = 0x4, scoped, tag = 'scoped memory for tpu_custom_call.1']
    #allocation7 [shape = 'u8[16384]{0}', space=vmem, size = 0x4000, scoped, tag = 'input window, operand 2, single buffered']
    #allocation8 [shape = 'u8[4096]{0}', space=vmem, size = 0x1000, scoped, tag = 'output window, operand 0, single buffered']
    #allocation9 [shape = 'u8[4096]{0}', space=vmem, size = 0x1000, scoped, tag = 'output window, operand 1, single buffered']
    #allocation10 [shape = 's32[1]{0}', space=sflag, size = 0x4, scoped, tag = 'scoped memory for tpu_custom_call.1']
    %10 = vsyncpa [#allocation3], 0
    %11 = vsyncpa [#allocation6], 0
    %12 = vsyncpa [#allocation4], 0
    %13 = vsyncpa [#allocation10], 0
    // Predicated region
    $region2: #{tpu_custom_call.1} parent=1 // pred_check
      _
    $region3: #{tpu_custom_call.1} parent=1 // pred_check_branch
      %15 = sbr.rel (0) target = $region5
    $region4: #{tpu_custom_call.1} parent=1 // pred_region
      %s16 = sadd.s32 0, 0
      %p17 = scmp.lt.s32.totalorder %s16, 0
      %s18 = scalar_select %p17, %s16, 0
      %s19 = smul.u32 8, %s18
      %s20 = ssub.s32 1, %s19
      %s21 = smul.u32 64, %s20
      %s23 = ssub.s32 512, %s21
      %24 = vsyncadd [#allocation3], %s23
      %p25 = scmp.ne.s32.totalorder 0, %s21
      %s26 = smul.addr %s19, 64
      %s27 = scalar_lea.hbm %s0, %s26
      %s28 = smul.u32 4, %s20
      %s29 = sshll.u32 [#allocation2], 4
      %s30 = int_to_ptr.vmem [resolvable:$true] %s29
      %s31 = sshll.u32 %s28, 4
      %35 = dma.hbm_to_vmem [thread:$0]  (%p25), %s27, %s31, %s30, [#allocation3], 64, 64, 4
    $region5: #{tpu_custom_call.1} parent=1 // pred_fallthru
      _
    // Predicated region
    $region6: #{tpu_custom_call.1} parent=1 // pred_check
      _
    $region7: #{tpu_custom_call.1} parent=1 // pred_check_branch
      %37 = sbr.rel (0) target = $region9
    $region8: #{tpu_custom_call.1} parent=1 // pred_region
      %s38 = sadd.s32 0, 0
      %p39 = scmp.lt.s32.totalorder %s38, 0
      %s40 = scalar_select %p39, %s38, 0
      %s41 = smul.u32 8, %s40
      %s42 = ssub.s32 1, %s41
      %s43 = smul.u32 64, %s42
      %s45 = ssub.s32 512, %s43
      %46 = vsyncadd [#allocation6], %s45
      %p47 = scmp.ne.s32.totalorder 0, %s43
      %s48 = smul.addr %s41, 64
      %s49 = scalar_lea.hbm %s1, %s48
      %s50 = smul.u32 4, %s42
      %s51 = sshll.u32 [#allocation5], 4
      %s52 = int_to_ptr.vmem [resolvable:$true] %s51
      %s53 = sshll.u32 %s50, 4
      %57 = dma.hbm_to_vmem [thread:$0]  (%p47), %s49, %s53, %s52, [#allocation6], 64, 64, 4
    $region9: #{tpu_custom_call.1} parent=1 // pred_fallthru
      _
    // Predicated region
    $region10: #{tpu_custom_call.1} parent=1 // pred_check
      _
    $region11: #{tpu_custom_call.1} parent=1 // pred_check_branch
      %59 = sbr.rel (0) target = $region13
    $region12: #{tpu_custom_call.1} parent=1 // pred_region
      %s60 = sadd.s32 0, 0
      %p61 = scmp.lt.s32.totalorder %s60, 0
      %s62 = scalar_select %p61, %s60, 0
      %s63 = smul.u32 8, %s62
      %s64 = ssub.s32 1, %s63
      %s65 = smul.u32 64, %s64
      %s67 = ssub.s32 512, %s65
      %68 = vsyncadd [#allocation6], %s67
      %p69 = scmp.ne.s32.totalorder 0, %s65
      %s70 = smul.addr %s63, 64
      %s71 = scalar_lea.hbm %s2, %s70
      %s72 = smul.u32 4, %s64
      %s73 = sshll.u32 [#allocation7], 4
      %s74 = int_to_ptr.vmem [resolvable:$true] %s73
      %s75 = sshll.u32 %s72, 4
      %79 = dma.hbm_to_vmem [thread:$0]  (%p69), %s71, %s75, %s74, [#allocation6], 64, 64, 4
    $region13: #{tpu_custom_call.1} parent=1 // pred_fallthru
      _
    // Predicated region
    $region14: #{tpu_custom_call.1} parent=1 // pred_check
      _
    $region15: #{tpu_custom_call.1} parent=1 // pred_check_branch
      %81 = sbr.rel (0) target = $region17
    $region16: #{tpu_custom_call.1} parent=1 // pred_region
      %82 = dma.done [#allocation3], 512
    $region17: #{tpu_custom_call.1} parent=1 // pred_fallthru
      _
    // Predicated region
    $region18: #{tpu_custom_call.1} parent=1 // pred_check
      _
    $region19: #{tpu_custom_call.1} parent=1 // pred_check_branch
      %84 = sbr.rel (0) target = $region21
    $region20: #{tpu_custom_call.1} parent=1 // pred_region
      %85 = dma.done [#allocation6], 512
    $region21: #{tpu_custom_call.1} parent=1 // pred_fallthru
      _
    // Predicated region
    $region22: #{tpu_custom_call.1} parent=1 // pred_check
      _
    $region23: #{tpu_custom_call.1} parent=1 // pred_check_branch
      %87 = sbr.rel (0) target = $region25
    $region24: #{tpu_custom_call.1} parent=1 // pred_region
      %88 = dma.done [#allocation6], 512
    $region25: #{tpu_custom_call.1} parent=1 // pred_fallthru
      _
    %s89 = sadd.s32 0, 0
    %p90 = scmp.lt.s32.totalorder %s89, 0
    %s91 = scalar_select %p90, %s89, 0
    %s92 = smul.u32 8, %s91
    %s93 = ssub.s32 1, %s92
    %s94 = smul.u32 64, %s93
    %s95 = sadd.s32 0, 0
    %p96 = scmp.lt.s32.totalorder %s95, 0
    %s97 = scalar_select %p96, %s95, 0
    %s98 = smul.u32 8, %s97
    %s99 = ssub.s32 1, %s98
    %s100 = smul.u32 64, %s99
    %s101 = sadd.s32 0, 0
    %p102 = scmp.lt.s32.totalorder %s101, 0
    %s103 = scalar_select %p102, %s101, 0
    %s104 = smul.u32 8, %s103
    %s105 = ssub.s32 1, %s104
    %s106 = smul.u32 64, %s105
    %p107 = scmp.eq.s32.totalorder 0, 0
    // Predicated region
    $region26: #{tpu_custom_call.1} parent=1 // pred_check
      %p108 = pneg %p107
    $region27: #{tpu_custom_call.1} parent=1 // pred_check_branch
      %110 = sbr.rel (%p108) target = $region29
    $region28: #{tpu_custom_call.1} parent=1 // pred_region
      %111 = vst [vmem:[#allocation8] sm:$0xff] 0.0
      %112 = vst [vmem:[#allocation9] sm:$0xff] 0.0
    $region29: #{tpu_custom_call.1} parent=1 // pred_fallthru
      _
    %v113 = vld [vmem:[#allocation2] sm:$0xff]
    %v114 = vld [vmem:[#allocation2 + $0x8] sm:$0xff]
    %v115 = vld [vmem:[#allocation2 + $0x10] sm:$0xff]
    %v116 = vld [vmem:[#allocation2 + $0x18] sm:$0xff]
    %v117 = vld [vmem:[#allocation5] sm:$0xff]
    %v118 = vld [vmem:[#allocation5 + $0x8] sm:$0xff]
    %v119 = vld [vmem:[#allocation5 + $0x10] sm:$0xff]
    %v120 = vld [vmem:[#allocation5 + $0x18] sm:$0xff]
    %v121 = vld [vmem:[#allocation7] sm:$0xff]
    %v122 = vld [vmem:[#allocation7 + $0x8] sm:$0xff]
    %v123 = vld [vmem:[#allocation7 + $0x10] sm:$0xff]
    %v124 = vld [vmem:[#allocation7 + $0x18] sm:$0xff]
    %v125 = vmul.f32 %v113, %v121
    %v126 = vmul.f32 %v114, %v122
    %v127 = vmul.f32 %v115, %v123
    %v128 = vmul.f32 %v116, %v124
    %v129 = vmul.f32 %v117, %v121
    %v130 = vmul.f32 %v118, %v122
    %v131 = vmul.f32 %v119, %v123
    %v132 = vmul.f32 %v120, %v124
    %v133 = vsub.f32 %v125, %v129
    %v134 = vsub.f32 %v126, %v130
    %v135 = vsub.f32 %v127, %v131
    %v136 = vsub.f32 %v128, %v132
    %v137 = vand.u32 2147483647, %v133
    %v138 = vand.u32 2147483647, %v134
    %v139 = vand.u32 2147483647, %v135
    %v140 = vand.u32 2147483647, %v136
    %vm141 = vcmp.ne.f32.partialorder %v121, 0.0
    %vm142 = vcmp.ne.f32.partialorder %v122, 0.0
    %vm143 = vcmp.ne.f32.partialorder %v123, 0.0
    %vm144 = vcmp.ne.f32.partialorder %v124, 0.0
    %v145 = vsel %vm141, 1, 0
    %v146 = vsel %vm142, 1, 0
    %v147 = vsel %vm143, 1, 0
    %v148 = vsel %vm144, 1, 0
    %v149 = vcvt.s32.f32 %v145
    %v150 = vcvt.s32.f32 %v146
    %v151 = vcvt.s32.f32 %v147
    %v152 = vcvt.s32.f32 %v148
    %s153 = sadd.s32 0, 0
    %s154 = smul.u32 %s153, 32
    %v155 = vlaneseq
    %v156 = vshrl.u32 %v155, 7
    %v157 = vadd.s32 %v156, 8
    %v158 = vadd.s32 %v156, 16
    %v159 = vadd.s32 %v156, 24
    %v160 = vstv %s154
    %v161 = vadd.s32 %v160, %v156
    %v162 = vadd.s32 %v160, %v157
    %v163 = vadd.s32 %v160, %v158
    %v164 = vadd.s32 %v160, %v159
    %vm165 = vcmp.lt.s32.totalorder %v161, 4
    %vm166 = vcmp.lt.s32.totalorder %v162, 4
    %vm167 = vcmp.lt.s32.totalorder %v163, 4
    %vm168 = vcmp.lt.s32.totalorder %v164, 4
    %v169 = vsel %vm165, %v137, 0.0
    %v170 = vsel %vm166, %v138, 0.0
    %v171 = vsel %vm167, %v139, 0.0
    %v172 = vsel %vm168, %v140, 0.0
    %v173 = vsel %vm165, %v149, 0.0
    %v174 = vsel %vm166, %v150, 0.0
    %v175 = vsel %vm167, %v151, 0.0
    %v176 = vsel %vm168, %v152, 0.0
    %v177 = vld [vmem:[#allocation8] sm:$0xff]
    %v178 = vadd.f32 %v169, %v170
    %v179 = vadd.f32 %v178, %v171
    %v180 = vadd.f32 %v179, %v172
    %v181 = vadd.f32 %v177, %v180
    %182 = vst [vmem:[#allocation8] sm:$0xff] %v181
    %v183 = vld [vmem:[#allocation9] sm:$0xff]
    %v184 = vadd.f32 %v173, %v174
    %v185 = vadd.f32 %v184, %v175
    %v186 = vadd.f32 %v185, %v176
    %v187 = vadd.f32 %v183, %v186
    %188 = vst [vmem:[#allocation9] sm:$0xff] %v187
    // Predicated region
    $region30: #{tpu_custom_call.1} parent=1 // pred_check
      _
    $region31: #{tpu_custom_call.1} parent=1 // pred_check_branch
      %190 = sbr.rel (0) target = $region33
    $region32: #{tpu_custom_call.1} parent=1 // pred_region
      %s192 = ssub.s32 128, 128
      %193 = vsyncadd [#allocation4], %s192
      %s195 = sshll.u32 [#allocation8], 4
      %s196 = int_to_ptr.vmem [resolvable:$true] %s195
      %198 = dma.vmem_to_hbm [thread:$0]  %s196, 128, %s3, [#allocation4]
    $region33: #{tpu_custom_call.1} parent=1 // pred_fallthru
      _
    // Predicated region
    $region34: #{tpu_custom_call.1} parent=1 // pred_check
      _
    $region35: #{tpu_custom_call.1} parent=1 // pred_check_branch
      %200 = sbr.rel (0) target = $region37
    $region36: #{tpu_custom_call.1} parent=1 // pred_region
      %s202 = ssub.s32 128, 128
      %203 = vsyncadd [#allocation10], %s202
      %s205 = sshll.u32 [#allocation9], 4
      %s206 = int_to_ptr.vmem [resolvable:$true] %s205
      %208 = dma.vmem_to_hbm [thread:$0]  %s206, 128, %s4, [#allocation10]
    $region37: #{tpu_custom_call.1} parent=1 // pred_fallthru
      _
    // Predicated region
    $region38: #{tpu_custom_call.1} parent=1 // pred_check
      _
    $region39: #{tpu_custom_call.1} parent=1 // pred_check_branch
      %210 = sbr.rel (0) target = $region41
    $region40: #{tpu_custom_call.1} parent=1 // pred_region
      %211 = dma.done [#allocation4], 128
    $region41: #{tpu_custom_call.1} parent=1 // pred_fallthru
      _
    // Predicated region
    $region42: #{tpu_custom_call.1} parent=1 // pred_check
      _
    $region43: #{tpu_custom_call.1} parent=1 // pred_check_branch
      %213 = sbr.rel (0) target = $region45
    $region44: #{tpu_custom_call.1} parent=1 // pred_region
      %214 = dma.done [#allocation10], 128
    $region45: #{tpu_custom_call.1} parent=1 // pred_fallthru
      _
    %215 = vsyncpa [#allocation3], 1
    %216 = vsyncpa [#allocation6], 1
    %217 = vsyncpa [#allocation4], 1
    %218 = vsyncpa [#allocation10], 1

</llo_original>
